<compile_context>
chip_gen: v5e
topology: v5e:2x2
jax: 0.10.0
libtpu: 0.0.40
codegen_flags: <defaults>
</compile_context>

<pallas_src>
import functools

import jax
import jax.numpy as jnp
from jax.experimental import pallas as pl
from jax.experimental.pallas import tpu as pltpu


# ---------------------------------------------------------------------------
# Operator construction (data-independent setup; cached like weights).
# ---------------------------------------------------------------------------
@functools.lru_cache(maxsize=8)   # bounded: each entry pins HBM buffers
def _build_operators(S1, S2, S3, m1, m2, m3):
    assert m1 <= S1 // 2 and m2 <= S2 // 2 and m3 <= S3 // 2 + 1, \
        "modes must satisfy modes_a <= S_a//2 (and modes3 <= S3//2+1)"

    def full_axis_proj(S, m):
        # Complex S x S matrix P with P @ z == ifft(mask * fft(z)).
        k = jnp.arange(S)
        mask = ((k < m) | (k >= S - m)).astype(jnp.complex64)
        F = jnp.fft.fft(jnp.eye(S, dtype=jnp.complex64), axis=0)   # cols = fft(e_p)
        return jnp.fft.ifft(mask[:, None] * F, axis=0)             # (S, S) complex

    P1 = full_axis_proj(S1, m1)      # axis-1 projection (complex)
    P2 = full_axis_proj(S2, m2)      # axis-2 projection (complex)

    # Joint real operators over axes (2,3), built on basis planes so the exact
    # jnp.fft rfft/irfft conventions are baked in.
    S3h = S3 // 2 + 1
    mask3 = (jnp.arange(S3h) < m3).astype(jnp.float32)
    basis = jnp.eye(S2 * S3, dtype=jnp.float32).reshape(S2 * S3, S2, S3)
    Z = mask3[None, None, :] * jnp.fft.rfft(basis, axis=2)          # (S2*S3, S2, S3h)
    # Apply P2 along the S2 axis (real einsums to avoid complex dot lowering).
    Wr = (jnp.einsum('qp,bpk->bqk', jnp.real(P2), jnp.real(Z))
          - jnp.einsum('qp,bpk->bqk', jnp.imag(P2), jnp.imag(Z)))
    Wi = (jnp.einsum('qp,bpk->bqk', jnp.real(P2), jnp.imag(Z))
          + jnp.einsum('qp,bpk->bqk', jnp.imag(P2), jnp.real(Z)))
    W = Wr + 1j * Wi                                                # (S2*S3, S2, S3h)
    Ka = jnp.fft.irfft(W, n=S3, axis=2).reshape(S2 * S3, S2 * S3)
    Kb = jnp.fft.irfft(1j * W, n=S3, axis=2).reshape(S2 * S3, S2 * S3)

    K = jnp.concatenate([Ka, Kb], axis=1).astype(jnp.float32)       # (n23, 2*n23)
    # Merged epilogue operator: [Re(P1) | Im(P1)]  (S1, 2*S1)
    A = jnp.concatenate([jnp.real(P1), jnp.imag(P1)], axis=1).astype(jnp.float32)
    return K, A


# ---------------------------------------------------------------------------
# Fused Pallas kernel.  Per grid step (Bt batch elements, all resident in VMEM):
#   w  = reshape(x, (Bt*S1, n23)) @ [Ka | Kb]        -> (Bt*S1, 2*n23)  MXU
#   y_b = [Ar | Ai] @ [w_b[:, :n23] ; w_b[:, n23:]]  -> (S1, n23)  per batch elt
# ---------------------------------------------------------------------------
def _spectral_kernel(x_ref, k_ref, a_ref, o_ref):
    n23 = k_ref.shape[0]
    Bt, S1 = x_ref.shape[0], x_ref.shape[1]

    # One big MXU matmul for all Bt batch elements (M = Bt*S1 rows).
    xf = x_ref[...].reshape(Bt * S1, n23).astype(jnp.float32)
    w = jnp.dot(xf, k_ref[...], preferred_element_type=jnp.float32)   # (Bt*S1, 2*n23)

    a = a_ref[...]                                                    # (S1, 2*S1)
    for b in range(Bt):   # static unroll; Bt is small
        wb = w[b * S1:(b + 1) * S1]                                   # (S1, 2*n23)
        stacked = jnp.concatenate([wb[:, :n23], wb[:, n23:]], axis=0)  # (2*S1, n23)
        y = jnp.dot(a, stacked, preferred_element_type=jnp.float32)   # (S1, n23)
        o_ref[b] = y.astype(o_ref.dtype)


def _choose_batch_tile(B, S1):
    # Aim for ~256 MXU rows (full height on v6e/v7x; two passes on v5e's 128),
    # but keep >= 2 grid steps so v7x's two TensorCores both get work.
    target = max(1, 256 // S1)
    cap = max(1, B // 2)
    best = 1
    for bt in range(1, min(B, target, cap) + 1):
        if B % bt == 0:
            best = bt
    return best


def spectral_truncate(x, modes1, modes2, modes3):
    B, S1, S2, S3 = x.shape
    K, A = _build_operators(S1, S2, S3, modes1, modes2, modes3)
    n23 = S2 * S3
    Bt = _choose_batch_tile(B, S1)
    x2 = x.reshape(B, S1, n23)            # free reshape; f32 cast happens in-kernel

    in_itemsize = jnp.dtype(x.dtype).itemsize
    op_bytes = int(K.size + A.size) * 4
    # Single-buffer the grid-invariant operators only once they are big enough
    # to matter (keeps the tiny-shape hot path identical to the validated one).
    single_buffer_ops = op_bytes > (4 << 20)
    inv_kw = {"pipeline_mode": pl.Buffered(1)} if single_buffer_ops else {}

    # VMEM footprint estimate: double-buffered x/y blocks + operators + temps.
    vmem_need = int(1.25 * (2 * Bt * S1 * n23 * (in_itemsize + 4)
                            + (1 if single_buffer_ops else 2) * op_bytes
                            + 2 * Bt * S1 * 2 * n23 * 4))
    vmem_limit = min(vmem_need, 120 << 20) if vmem_need > (16 << 20) else None

    flops = B * (2 * S1 * n23 * (2 * n23) + 2 * (2 * S1) * S1 * n23)
    bytes_accessed = (x.size * in_itemsize + op_bytes + B * S1 * n23 * in_itemsize)
    cost = pl.CostEstimate(flops=flops, transcendentals=0,
                           bytes_accessed=bytes_accessed)

    y2 = pl.pallas_call(
        _spectral_kernel,
        out_shape=jax.ShapeDtypeStruct((B, S1, n23), x.dtype),
        grid=(B // Bt,),
        in_specs=[
            pl.BlockSpec((Bt, S1, n23), lambda g: (g, 0, 0)),
            pl.BlockSpec((n23, 2 * n23), lambda g: (0, 0), **inv_kw),
            pl.BlockSpec((S1, 2 * S1), lambda g: (0, 0), **inv_kw),
        ],
        out_specs=pl.BlockSpec((Bt, S1, n23), lambda g: (g, 0, 0)),
        compiler_params=pltpu.CompilerParams(
            dimension_semantics=("parallel",),     # grid split across v7x's 2 TCs
            vmem_limit_bytes=vmem_limit),
        cost_estimate=cost,
    )(x2, K, A)

    return y2.reshape(B, S1, S2, S3)


if __name__ == "__main__":
    key = jax.random.PRNGKey(0)
    B, S1, S2, S3 = 4, 16, 16, 16
    m1, m2, m3 = 4, 4, 4

    x = jax.random.normal(key, (B, S1, S2, S3), dtype=jnp.float32)

    y = spectral_truncate(x, m1, m2, m3)
    y = jax.block_until_ready(y)

    # Reference: rfftn -> corner-block truncation -> irfftn with norm="ortho"
    # (the jnp equivalent of torch.rfft/irfft(normalized=True, onesided=True)),
    # written as the per-axis composition so the check does not depend on
    # backend conventions for the truncated (non-Hermitian) planes.
    xf = jnp.fft.rfft(x, axis=3, norm="ortho")
    xf = jnp.fft.fft(xf, axis=2, norm="ortho")
    xf = jnp.fft.fft(xf, axis=1, norm="ortho")
    out_ft = jnp.zeros_like(xf)
    out_ft = out_ft.at[:, :m1, :m2, :m3].set(xf[:, :m1, :m2, :m3])
    out_ft = out_ft.at[:, -m1:, :m2, :m3].set(xf[:, -m1:, :m2, :m3])
    out_ft = out_ft.at[:, :m1, -m2:, :m3].set(xf[:, :m1, -m2:, :m3])
    out_ft = out_ft.at[:, -m1:, -m2:, :m3].set(xf[:, -m1:, -m2:, :m3])
    yf = jnp.fft.ifft(out_ft, axis=1, norm="ortho")
    yf = jnp.fft.ifft(yf, axis=2, norm="ortho")
    ref = jnp.fft.irfft(yf, n=S3, axis=3, norm="ortho")

    err = float(jnp.max(jnp.abs(y - ref)))
    assert err < 1e-3, f"max abs error {err}"
    print("KERNEL_OK")
</pallas_src>

<mosaic_0001>
module attributes {stable_mosaic.version = 11 : i64} {
  func.func @_spectral_kernel(%arg0: i32, %arg1: memref<2x16x256xf32, #tpu.memory_space<vmem>>, %arg2: memref<256x512xf32, #tpu.memory_space<vmem>>, %arg3: memref<16x32xf32, #tpu.memory_space<vmem>>, %arg4: memref<2x16x256xf32, #tpu.memory_space<vmem>>) attributes {dimension_semantics = [#tpu.dimension_semantics<parallel>], iteration_bounds = array<i64: 2>, scalar_prefetch = 0 : i64, scratch_operands = 0 : i64, tpu.core_type = #tpu.core_type<tc>, window_params = [{transform_indices = @transform_0, window_bounds = array<i64: 2, 16, 256>}, {pipeline_mode = #tpu.pipeline_mode<synchronous>, transform_indices = @transform_1, window_bounds = array<i64: 256, 512>}, {pipeline_mode = #tpu.pipeline_mode<synchronous>, transform_indices = @transform_2, window_bounds = array<i64: 16, 32>}, {transform_indices = @transform_3, window_bounds = array<i64: 2, 16, 256>}]} {
    %c0 = arith.constant 0 : index
    %c0_0 = arith.constant 0 : index
    %c0_1 = arith.constant 0 : index
    %0 = vector.load %arg1[%c0, %c0_0, %c0_1] : memref<2x16x256xf32, #tpu.memory_space<vmem>>, vector<2x16x256xf32>
    %1 = vector.shape_cast %0 : vector<2x16x256xf32> to vector<32x256xf32>
    %c0_2 = arith.constant 0 : index
    %c0_3 = arith.constant 0 : index
    %2 = vector.load %arg2[%c0_2, %c0_3] : memref<256x512xf32, #tpu.memory_space<vmem>>, vector<256x512xf32>
    %cst = arith.constant dense<0.000000e+00> : vector<32x512xf32>
    %3 = tpu.matmul %1, %2, %cst {dimension_numbers = #tpu.dot_dimension_numbers<[1], [0], [0], [1], [0, 0, 1, 1], [], []>} : vector<32x256xf32>, vector<256x512xf32>, vector<32x512xf32> -> vector<32x512xf32>
    %c0_4 = arith.constant 0 : index
    %c0_5 = arith.constant 0 : index
    %4 = vector.load %arg3[%c0_4, %c0_5] : memref<16x32xf32, #tpu.memory_space<vmem>>, vector<16x32xf32>
    %5 = vector.extract_strided_slice %3 {offsets = [0, 0], sizes = [16, 512], strides = [1, 1]} : vector<32x512xf32> to vector<16x512xf32>
    %6 = vector.extract_strided_slice %5 {offsets = [0, 0], sizes = [16, 256], strides = [1, 1]} : vector<16x512xf32> to vector<16x256xf32>
    %7 = vector.extract_strided_slice %5 {offsets = [0, 256], sizes = [16, 256], strides = [1, 1]} : vector<16x512xf32> to vector<16x256xf32>
    %8 = tpu.concatenate %6, %7 in 0 : vector<16x256xf32>, vector<16x256xf32> -> vector<32x256xf32>
    %cst_6 = arith.constant dense<0.000000e+00> : vector<16x256xf32>
    %9 = tpu.matmul %4, %8, %cst_6 {dimension_numbers = #tpu.dot_dimension_numbers<[1], [0], [0], [1], [0, 0, 1, 1], [], []>} : vector<16x32xf32>, vector<32x256xf32>, vector<16x256xf32> -> vector<16x256xf32>
    %c0_7 = arith.constant 0 : index
    %c0_8 = arith.constant 0 : index
    %c0_9 = arith.constant 0 : index
    %10 = vector.load %arg4[%c0_7, %c0_8, %c0_9] : memref<2x16x256xf32, #tpu.memory_space<vmem>>, vector<1x16x256xf32>
    %11 = vector.shape_cast %10 : vector<1x16x256xf32> to vector<16x256xf32>
    %12 = vector.shape_cast %9 : vector<16x256xf32> to vector<1x16x256xf32>
    tpu.vector_store %arg4[%c0_7, %c0_8, %c0_9], %12 {strides = array<i32>} : memref<2x16x256xf32, #tpu.memory_space<vmem>>, vector<1x16x256xf32>,
    %13 = vector.extract_strided_slice %3 {offsets = [16, 0], sizes = [16, 512], strides = [1, 1]} : vector<32x512xf32> to vector<16x512xf32>
    %14 = vector.extract_strided_slice %13 {offsets = [0, 0], sizes = [16, 256], strides = [1, 1]} : vector<16x512xf32> to vector<16x256xf32>
    %15 = vector.extract_strided_slice %13 {offsets = [0, 256], sizes = [16, 256], strides = [1, 1]} : vector<16x512xf32> to vector<16x256xf32>
    %16 = tpu.concatenate %14, %15 in 0 : vector<16x256xf32>, vector<16x256xf32> -> vector<32x256xf32>
    %cst_10 = arith.constant dense<0.000000e+00> : vector<16x256xf32>
    %17 = tpu.matmul %4, %16, %cst_10 {dimension_numbers = #tpu.dot_dimension_numbers<[1], [0], [0], [1], [0, 0, 1, 1], [], []>} : vector<16x32xf32>, vector<32x256xf32>, vector<16x256xf32> -> vector<16x256xf32>
    %c1 = arith.constant 1 : index
    %c0_11 = arith.constant 0 : index
    %c0_12 = arith.constant 0 : index
    %18 = vector.load %arg4[%c1, %c0_11, %c0_12] : memref<2x16x256xf32, #tpu.memory_space<vmem>>, vector<1x16x256xf32>
    %19 = vector.shape_cast %18 : vector<1x16x256xf32> to vector<16x256xf32>
    %20 = vector.shape_cast %17 : vector<16x256xf32> to vector<1x16x256xf32>
    tpu.vector_store %arg4[%c1, %c0_11, %c0_12], %20 {strides = array<i32>} : memref<2x16x256xf32, #tpu.memory_space<vmem>>, vector<1x16x256xf32>,
    return
  }
  func.func @transform_0(%arg0: i32) -> (i32, i32, i32) {
    %c0_i32 = arith.constant 0 : i32
    %c0_i32_0 = arith.constant 0 : i32
    %c0_i32_1 = arith.constant 0 : i32
    return %arg0, %c0_i32, %c0_i32_0 : i32, i32, i32
  }
  func.func @transform_1(%arg0: i32) -> (i32, i32) {
    %c0_i32 = arith.constant 0 : i32
    %c0_i32_0 = arith.constant 0 : i32
    %c0_i32_1 = arith.constant 0 : i32
    return %c0_i32, %c0_i32_0 : i32, i32
  }
  func.func @transform_2(%arg0: i32) -> (i32, i32) {
    %c0_i32 = arith.constant 0 : i32
    %c0_i32_0 = arith.constant 0 : i32
    %c0_i32_1 = arith.constant 0 : i32
    return %c0_i32, %c0_i32_0 : i32, i32
  }
  func.func @transform_3(%arg0: i32) -> (i32, i32, i32) {
    %c0_i32 = arith.constant 0 : i32
    %c0_i32_0 = arith.constant 0 : i32
    %c0_i32_1 = arith.constant 0 : i32
    return %arg0, %c0_i32, %c0_i32_0 : i32, i32, i32
  }
}

</mosaic_0001>

<llo_original>
// kernel: tpu_custom_call.1
$region0: #{tpu_custom_call.1}
  #allocation0 [shape = 'u32[]', space=smem, size = 0x4, offset = 0x4, fixed_abs, tag = 'smem constant byte address 0x4 - core index']
  #allocation1 [shape = 'u32[72,128]{1,0:T(1,128)}', space=vmem, size = 0x9000, scoped, tag = 'internal scratch']
  %s0 = inlined_call_operand.hbm [shape: f32[4,16,256], index: 0, kind: input, shape index: {}]
  %s1 = inlined_call_operand.hbm [shape: f32[256,512], index: 1, kind: input, shape index: {}]
  %s2 = inlined_call_operand.hbm [shape: f32[16,32], index: 2, kind: input, shape index: {}]
  %s3 = inlined_call_operand.hbm [shape: f32[4,16,256], index: 3, kind: output, shape index: {}]
  %s4 = sld [smem:[#allocation0]]
  $region57: #{tpu_custom_call.1} parent=0
    _
  %s6 = ssub.s32 1, %s4
  %s7 = scalar_select 0, %s6, %s4
  $region1: #{tpu_custom_call.1} parent=0
    #allocation2 [shape = 'u8[65536]{0}', space=vmem, size = 0x10000, scoped, tag = 'input window, operand 0']
    #allocation3 [shape = 's32[2]{0}', space=sflag, size = 0x8, scoped, tag = 'scoped memory for tpu_custom_call.1']
    #allocation4 [shape = 's32[2]{0}', space=sflag, size = 0x8, scoped, tag = 'scoped memory for tpu_custom_call.1']
    #allocation5 [shape = 'u8[524288]{0}', space=vmem, size = 0x80000, scoped, tag = 'input window, operand 1, single buffered']
    #allocation6 [shape = 's32[1]{0}', space=sflag, size = 0x4, scoped, tag = 'scoped memory for tpu_custom_call.1']
    #allocation7 [shape = 'u8[8192]{0}', space=vmem, size = 0x2000, scoped, tag = 'input window, operand 2, single buffered']
    #allocation8 [shape = 'u8[65536]{0}', space=vmem, size = 0x10000, scoped, tag = 'output window, operand 0']
    %8 = vsyncpa [#allocation3], 0
    %s9 = scalar_lea.sflag [#allocation3], 1
    %10 = vsyncpa %s9, 0
    %11 = vsyncpa [#allocation6], 0
    %12 = vsyncpa [#allocation4], 0
    %s13 = scalar_lea.sflag [#allocation4], 1
    %14 = vsyncpa %s13, 0
    loop: start=0, step=1, limit=4
    $region2: #{tpu_custom_call.1} parent=1 // loop_pre_header
      _
    $region3: #{tpu_custom_call.1} parent=1 // loop_header
      %s16 = sphi 0, %s20
      %p17 = scmp.ge.s32.totalorder %s16, 4
      %s26 = sphi 0, %s28
      %s29 = sphi 0, %s26
      %s30 = sphi 0, %s29
      %s46 = sphi 0, %s30
      %s50 = sphi 0, %s50
      %s52 = sphi 0, %s50
      %s53 = sphi 0, %s52
      %s67 = sphi 0, %s53
      %s71 = sphi 0, %s71
      %s73 = sphi 0, %s71
      %s74 = sphi 0, %s73
      %s88 = sphi 0, %s74
      %s94 = sphi 0, %s96
      %s97 = sphi 0, %s94
      %s98 = sphi 0, %s97
      %s114 = sphi 0, %s98
    $region4: #{tpu_custom_call.1} parent=1 // loop_header_branch
      %19 = sbr.rel (%p17) target = $region8
    $region5: #{tpu_custom_call.1} parent=1 // loop_body
      %s21 = ssub.s32 %s16, 1
      %s22 = ssub.s32 %s16, 2
      %s23 = sadd.s32 %s16, 1
      %s24 = ssub.s32 %s16, %s23
      %p25 = scmp.eq.s32.totalorder %s24, 0
      %s27 = sadd.s32 %s26, 1
      %s28 = scalar_select %p25, %s26, %s27
      %p31 = pneg %p25
      %p32 = scmp.eq.s32.totalorder %s16, 1
      %p33 = por %p31, %p32
      %p34 = scmp.ne.s32.totalorder %s26, %s29
      %p35 = scmp.eq.s32.totalorder %s16, 0
      %p36 = por %p34, %p35
      %p37 = scmp.ne.s32.totalorder %s26, %s29
      %p38 = scmp.eq.s32.totalorder %s21, 1
      %p39 = por %p37, %p38
      %p40 = scmp.ne.s32.totalorder %s29, %s30
      %p41 = scmp.eq.s32.totalorder %s21, 0
      %p42 = por %p40, %p41
      %p43 = scmp.ne.s32.totalorder %s29, %s30
      %p44 = scmp.eq.s32.totalorder %s22, 1
      %p45 = por %p43, %p44
      %p47 = scmp.ne.s32.totalorder %s30, %s46
      %p48 = scmp.eq.s32.totalorder %s22, 0
      %p49 = por %p47, %p48
      %s51 = sadd.s32 %s50, 1
      %p54 = scmp.eq.s32.totalorder %s16, 1
      %p55 = scmp.ne.s32.totalorder %s50, %s52
      %p56 = scmp.eq.s32.totalorder %s16, 0
      %p57 = por %p55, %p56
      %p58 = scmp.ne.s32.totalorder %s50, %s52
      %p59 = scmp.eq.s32.totalorder %s21, 1
      %p60 = por %p58, %p59
      %p61 = scmp.ne.s32.totalorder %s52, %s53
      %p62 = scmp.eq.s32.totalorder %s21, 0
      %p63 = por %p61, %p62
      %p64 = scmp.ne.s32.totalorder %s52, %s53
      %p65 = scmp.eq.s32.totalorder %s22, 1
      %p66 = por %p64, %p65
      %p68 = scmp.ne.s32.totalorder %s53, %s67
      %p69 = scmp.eq.s32.totalorder %s22, 0
      %p70 = por %p68, %p69
      %s72 = sadd.s32 %s71, 1
      %p75 = scmp.eq.s32.totalorder %s16, 1
      %p76 = scmp.ne.s32.totalorder %s71, %s73
      %p77 = scmp.eq.s32.totalorder %s16, 0
      %p78 = por %p76, %p77
      %p79 = scmp.ne.s32.totalorder %s71, %s73
      %p80 = scmp.eq.s32.totalorder %s21, 1
      %p81 = por %p79, %p80
      %p82 = scmp.ne.s32.totalorder %s73, %s74
      %p83 = scmp.eq.s32.totalorder %s21, 0
      %p84 = por %p82, %p83
      %p85 = scmp.ne.s32.totalorder %s73, %s74
      %p86 = scmp.eq.s32.totalorder %s22, 1
      %p87 = por %p85, %p86
      %p89 = scmp.ne.s32.totalorder %s74, %s88
      %p90 = scmp.eq.s32.totalorder %s22, 0
      %p91 = por %p89, %p90
      %s92 = ssub.s32 %s16, %s23
      %p93 = scmp.eq.s32.totalorder %s92, 0
      %s95 = sadd.s32 %s94, 1
      %s96 = scalar_select %p93, %s94, %s95
      %p99 = pneg %p93
      %p100 = scmp.eq.s32.totalorder %s16, 1
      %p101 = por %p99, %p100
      %p102 = scmp.ne.s32.totalorder %s94, %s97
      %p103 = scmp.eq.s32.totalorder %s16, 0
      %p104 = por %p102, %p103
      %p105 = scmp.ne.s32.totalorder %s94, %s97
      %p106 = scmp.eq.s32.totalorder %s21, 1
      %p107 = por %p105, %p106
      %p108 = scmp.ne.s32.totalorder %s97, %s98
      %p109 = scmp.eq.s32.totalorder %s21, 0
      %p110 = por %p108, %p109
      %p111 = scmp.ne.s32.totalorder %s97, %s98
      %p112 = scmp.eq.s32.totalorder %s22, 1
      %p113 = por %p111, %p112
      %p115 = scmp.ne.s32.totalorder %s98, %s114
      %p116 = scmp.eq.s32.totalorder %s22, 0
      %p117 = por %p115, %p116
      %p118 = scmp.le.s32.totalorder 1, %s16
      %p119 = scmp.lt.s32.totalorder %s16, 3
      %p120 = pnand %p118, %p119
      %p121 = pneg %p120
      // Predicated region
      $region9: #{tpu_custom_call.1} parent=5 // pred_check
        _
      $region10: #{tpu_custom_call.1} parent=5 // pred_check_branch
        %123 = sbr.rel (%p120) target = $region12
      $region11: #{tpu_custom_call.1} parent=5 // pred_region
        %s124 = ssub.s32 %s16, 1
        // Predicated region
        $region13: #{tpu_custom_call.1} parent=11 // pred_check
          %p125 = pneg %p63
        $region14: #{tpu_custom_call.1} parent=11 // pred_check_branch
          %127 = sbr.rel (%p125) target = $region16
        $region15: #{tpu_custom_call.1} parent=11 // pred_region
          %129 = vsyncadd [#allocation6], 0
          %s130 = sshll.u32 %s1, 4
          %s131 = int_to_ptr.hbm [resolvable:$true] %s130
          %s132 = sshll.u32 [#allocation5], 4
          %s133 = int_to_ptr.vmem [resolvable:$true] %s132
          %138 = dma.hbm_to_vmem [thread:$0]  %s131, 16384, %s133, [#allocation6], 512, 512, 32
        $region16: #{tpu_custom_call.1} parent=11 // pred_fallthru
          _
        // Predicated region
        $region17: #{tpu_custom_call.1} parent=11 // pred_check
          %p139 = pneg %p84
        $region18: #{tpu_custom_call.1} parent=11 // pred_check_branch
          %141 = sbr.rel (%p139) target = $region20
        $region19: #{tpu_custom_call.1} parent=11 // pred_region
          %143 = vsyncadd [#allocation6], 0
          %s144 = sshll.u32 %s2, 4
          %s145 = int_to_ptr.hbm [resolvable:$true] %s144
          %s146 = sshll.u32 [#allocation7], 4
          %s147 = int_to_ptr.vmem [resolvable:$true] %s146
          %152 = dma.hbm_to_vmem [thread:$0]  %s145, 256, %s147, [#allocation6], 128, 128, 8
        $region20: #{tpu_custom_call.1} parent=11 // pred_fallthru
          _
      $region12: #{tpu_custom_call.1} parent=5 // pred_fallthru
        _
      %p153 = scmp.lt.s32.totalorder %s16, 2
      // Predicated region
      $region21: #{tpu_custom_call.1} parent=5 // pred_check
        %p154 = pneg %p153
      $region22: #{tpu_custom_call.1} parent=5 // pred_check_branch
        %156 = sbr.rel (%p154) target = $region24
      $region23: #{tpu_custom_call.1} parent=5 // pred_region
        // Predicated region
        $region25: #{tpu_custom_call.1} parent=23 // pred_check
          %p157 = pneg %p36
        $region26: #{tpu_custom_call.1} parent=23 // pred_check_branch
          %159 = sbr.rel (%p157) target = $region28
        $region27: #{tpu_custom_call.1} parent=23 // pred_region
          %s160 = sand.u32 %s26, 1
          %s161 = scalar_lea.sflag [#allocation3], %s160
          %s162 = sand.u32 %s26, 1
          %s163 = smul.addr %s162, 64
          %s164 = scalar_lea.vmem [#allocation2], %s163
          %s165 = smul.u32 2, %s16
          %167 = vsyncadd %s161, 0
          %s168 = smul.addr %s165, 4
          %s169 = smul.addr %s168, 8
          %s170 = scalar_lea.hbm %s0, %s169
          %s171 = sshll.u32 %s170, 4
          %s172 = int_to_ptr.hbm [resolvable:$true] %s171
          %s173 = sshll.u32 %s164, 4
          %s174 = int_to_ptr.vmem [resolvable:$true] %s173
          %179 = dma.hbm_to_vmem [thread:$0]  %s172, 1024, %s174, %s161, 256, 256, 16
        $region28: #{tpu_custom_call.1} parent=23 // pred_fallthru
          _
      $region24: #{tpu_custom_call.1} parent=5 // pred_fallthru
        _
      %p180 = scmp.le.s32.totalorder 1, %s16
      %p181 = scmp.lt.s32.totalorder %s16, 3
      %p182 = pnand %p180, %p181
      %p183 = pneg %p182
      // Predicated region
      $region29: #{tpu_custom_call.1} parent=5 // pred_check
        _
      $region30: #{tpu_custom_call.1} parent=5 // pred_check_branch
        %185 = sbr.rel (%p182) target = $region32
      $region31: #{tpu_custom_call.1} parent=5 // pred_region
        %s186 = ssub.s32 %s16, 1
        %s187 = sand.u32 %s29, 1
        %s188 = scalar_lea.sflag [#allocation3], %s187
        %s189 = sand.u32 %s29, 1
        %s190 = smul.addr %s189, 64
        %s191 = scalar_lea.vmem [#allocation2], %s190
        // Predicated region
        $region33: #{tpu_custom_call.1} parent=31 // pred_check
          %p192 = pneg %p42
        $region34: #{tpu_custom_call.1} parent=31 // pred_check_branch
          %194 = sbr.rel (%p192) target = $region36
        $region35: #{tpu_custom_call.1} parent=31 // pred_region
          %196 = dma.done %s188, 1024
        $region36: #{tpu_custom_call.1} parent=31 // pred_fallthru
          _
        // Predicated region
        $region37: #{tpu_custom_call.1} parent=31 // pred_check
          %p197 = pneg %p63
        $region38: #{tpu_custom_call.1} parent=31 // pred_check_branch
          %199 = sbr.rel (%p197) target = $region40
        $region39: #{tpu_custom_call.1} parent=31 // pred_region
          %201 = dma.done [#allocation6], 16384
        $region40: #{tpu_custom_call.1} parent=31 // pred_fallthru
          _
        // Predicated region
        $region41: #{tpu_custom_call.1} parent=31 // pred_check
          %p202 = pneg %p84
        $region42: #{tpu_custom_call.1} parent=31 // pred_check_branch
          %204 = sbr.rel (%p202) target = $region44
        $region43: #{tpu_custom_call.1} parent=31 // pred_region
          %206 = dma.done [#allocation6], 256
        $region44: #{tpu_custom_call.1} parent=31 // pred_fallthru
          _
        %s207 = sand.u32 %s29, 1
        %s208 = scalar_lea.sflag [#allocation3], %s207
        %s209 = sand.u32 %s29, 1
        %s210 = smul.addr %s209, 64
        %s211 = scalar_lea.vmem [#allocation2], %s210
        %p212 = pneg %p42
        %p213 = pneg %p39
        %p214 = pneg %p63
        %p215 = pneg %p60
        %p216 = pneg %p84
        %p217 = pneg %p81
        %p218 = pneg %p110
        %p219 = pneg %p107
        %s220 = sand.u32 %s97, 1
        %s221 = scalar_lea.sflag [#allocation4], %s220
        %s222 = sand.u32 %s97, 1
        %s223 = smul.addr %s222, 64
        %s224 = scalar_lea.vmem [#allocation8], %s223
        %s225 = smul.u32 2, %s21
        %s226 = smul.u32 2, %s21
        %v227 = vld [vmem:[%s191] sm:$0xff]
        %v228 = vld [vmem:[%s191 + $0x8] sm:$0xff]
        %v229 = vld [vmem:[%s191 + $0x10] sm:$0xff]
        %v230 = vld [vmem:[%s191 + $0x18] sm:$0xff]
        %v231 = vld [vmem:[%s191 + $0x20] sm:$0xff]
        %v232 = vld [vmem:[%s191 + $0x28] sm:$0xff]
        %v233 = vld [vmem:[%s191 + $0x30] sm:$0xff]
        %v234 = vld [vmem:[%s191 + $0x38] sm:$0xff]
        %v235 = vld [vmem:[#allocation5] sm:$0xff]
        %v236 = vld [vmem:[#allocation5 + $0x8] sm:$0xff]
        %v237 = vld [vmem:[#allocation5 + $0x10] sm:$0xff]
        %v238 = vld [vmem:[#allocation5 + $0x18] sm:$0xff]
        %v239 = vld [vmem:[#allocation5 + $0x20] sm:$0xff]
        %v240 = vld [vmem:[#allocation5 + $0x28] sm:$0xff]
        %v241 = vld [vmem:[#allocation5 + $0x30] sm:$0xff]
        %v242 = vld [vmem:[#allocation5 + $0x38] sm:$0xff]
        %v243 = vld [vmem:[#allocation5 + $0x40] sm:$0xff]
        %v244 = vld [vmem:[#allocation5 + $0x48] sm:$0xff]
        %v245 = vld [vmem:[#allocation5 + $0x50] sm:$0xff]
        %v246 = vld [vmem:[#allocation5 + $0x58] sm:$0xff]
        %v247 = vld [vmem:[#allocation5 + $0x60] sm:$0xff]
        %v248 = vld [vmem:[#allocation5 + $0x68] sm:$0xff]
        %v249 = vld [vmem:[#allocation5 + $0x70] sm:$0xff]
        %v250 = vld [vmem:[#allocation5 + $0x78] sm:$0xff]
        %v251 = vld [vmem:[#allocation5 + $0x80] sm:$0xff]
        %v252 = vld [vmem:[#allocation5 + $0x88] sm:$0xff]
        %v253 = vld [vmem:[#allocation5 + $0x90] sm:$0xff]
        %v254 = vld [vmem:[#allocation5 + $0x98] sm:$0xff]
        %v255 = vld [vmem:[#allocation5 + $0xa0] sm:$0xff]
        %v256 = vld [vmem:[#allocation5 + $0xa8] sm:$0xff]
        %v257 = vld [vmem:[#allocation5 + $0xb0] sm:$0xff]
        %v258 = vld [vmem:[#allocation5 + $0xb8] sm:$0xff]
        %v259 = vld [vmem:[#allocation5 + $0xc0] sm:$0xff]
        %v260 = vld [vmem:[#allocation5 + $0xc8] sm:$0xff]
        %v261 = vld [vmem:[#allocation5 + $0xd0] sm:$0xff]
        %v262 = vld [vmem:[#allocation5 + $0xd8] sm:$0xff]
        %v263 = vld [vmem:[#allocation5 + $0xe0] sm:$0xff]
        %v264 = vld [vmem:[#allocation5 + $0xe8] sm:$0xff]
        %v265 = vld [vmem:[#allocation5 + $0xf0] sm:$0xff]
        %v266 = vld [vmem:[#allocation5 + $0xf8] sm:$0xff]
        %v267 = vld [vmem:[#allocation5 + $0x100] sm:$0xff]
        %v268 = vld [vmem:[#allocation5 + $0x108] sm:$0xff]
        %v269 = vld [vmem:[#allocation5 + $0x110] sm:$0xff]
        %v270 = vld [vmem:[#allocation5 + $0x118] sm:$0xff]
        %v271 = vld [vmem:[#allocation5 + $0x120] sm:$0xff]
        %v272 = vld [vmem:[#allocation5 + $0x128] sm:$0xff]
        %v273 = vld [vmem:[#allocation5 + $0x130] sm:$0xff]
        %v274 = vld [vmem:[#allocation5 + $0x138] sm:$0xff]
        %v275 = vld [vmem:[#allocation5 + $0x140] sm:$0xff]
        %v276 = vld [vmem:[#allocation5 + $0x148] sm:$0xff]
        %v277 = vld [vmem:[#allocation5 + $0x150] sm:$0xff]
        %v278 = vld [vmem:[#allocation5 + $0x158] sm:$0xff]
        %v279 = vld [vmem:[#allocation5 + $0x160] sm:$0xff]
        %v280 = vld [vmem:[#allocation5 + $0x168] sm:$0xff]
        %v281 = vld [vmem:[#allocation5 + $0x170] sm:$0xff]
        %v282 = vld [vmem:[#allocation5 + $0x178] sm:$0xff]
        %v283 = vld [vmem:[#allocation5 + $0x180] sm:$0xff]
        %v284 = vld [vmem:[#allocation5 + $0x188] sm:$0xff]
        %v285 = vld [vmem:[#allocation5 + $0x190] sm:$0xff]
        %v286 = vld [vmem:[#allocation5 + $0x198] sm:$0xff]
        %v287 = vld [vmem:[#allocation5 + $0x1a0] sm:$0xff]
        %v288 = vld [vmem:[#allocation5 + $0x1a8] sm:$0xff]
        %v289 = vld [vmem:[#allocation5 + $0x1b0] sm:$0xff]
        %v290 = vld [vmem:[#allocation5 + $0x1b8] sm:$0xff]
        %v291 = vld [vmem:[#allocation5 + $0x1c0] sm:$0xff]
        %v292 = vld [vmem:[#allocation5 + $0x1c8] sm:$0xff]
        %v293 = vld [vmem:[#allocation5 + $0x1d0] sm:$0xff]
        %v294 = vld [vmem:[#allocation5 + $0x1d8] sm:$0xff]
        %v295 = vld [vmem:[#allocation5 + $0x1e0] sm:$0xff]
        %v296 = vld [vmem:[#allocation5 + $0x1e8] sm:$0xff]
        %v297 = vld [vmem:[#allocation5 + $0x1f0] sm:$0xff]
        %v298 = vld [vmem:[#allocation5 + $0x1f8] sm:$0xff]
        %v299 = vld [vmem:[#allocation5 + $0x200] sm:$0xff]
        %v300 = vld [vmem:[#allocation5 + $0x208] sm:$0xff]
        %v301 = vld [vmem:[#allocation5 + $0x210] sm:$0xff]
        %v302 = vld [vmem:[#allocation5 + $0x218] sm:$0xff]
        %v303 = vld [vmem:[#allocation5 + $0x220] sm:$0xff]
        %v304 = vld [vmem:[#allocation5 + $0x228] sm:$0xff]
        %v305 = vld [vmem:[#allocation5 + $0x230] sm:$0xff]
        %v306 = vld [vmem:[#allocation5 + $0x238] sm:$0xff]
        %v307 = vld [vmem:[#allocation5 + $0x240] sm:$0xff]
        %v308 = vld [vmem:[#allocation5 + $0x248] sm:$0xff]
        %v309 = vld [vmem:[#allocation5 + $0x250] sm:$0xff]
        %v310 = vld [vmem:[#allocation5 + $0x258] sm:$0xff]
        %v311 = vld [vmem:[#allocation5 + $0x260] sm:$0xff]
        %v312 = vld [vmem:[#allocation5 + $0x268] sm:$0xff]
        %v313 = vld [vmem:[#allocation5 + $0x270] sm:$0xff]
        %v314 = vld [vmem:[#allocation5 + $0x278] sm:$0xff]
        %v315 = vld [vmem:[#allocation5 + $0x280] sm:$0xff]
        %v316 = vld [vmem:[#allocation5 + $0x288] sm:$0xff]
        %v317 = vld [vmem:[#allocation5 + $0x290] sm:$0xff]
        %v318 = vld [vmem:[#allocation5 + $0x298] sm:$0xff]
        %v319 = vld [vmem:[#allocation5 + $0x2a0] sm:$0xff]
        %v320 = vld [vmem:[#allocation5 + $0x2a8] sm:$0xff]
        %v321 = vld [vmem:[#allocation5 + $0x2b0] sm:$0xff]
        %v322 = vld [vmem:[#allocation5 + $0x2b8] sm:$0xff]
        %v323 = vld [vmem:[#allocation5 + $0x2c0] sm:$0xff]
        %v324 = vld [vmem:[#allocation5 + $0x2c8] sm:$0xff]
        %v325 = vld [vmem:[#allocation5 + $0x2d0] sm:$0xff]
        %v326 = vld [vmem:[#allocation5 + $0x2d8] sm:$0xff]
        %v327 = vld [vmem:[#allocation5 + $0x2e0] sm:$0xff]
        %v328 = vld [vmem:[#allocation5 + $0x2e8] sm:$0xff]
        %v329 = vld [vmem:[#allocation5 + $0x2f0] sm:$0xff]
        %v330 = vld [vmem:[#allocation5 + $0x2f8] sm:$0xff]
        %v331 = vld [vmem:[#allocation5 + $0x300] sm:$0xff]
        %v332 = vld [vmem:[#allocation5 + $0x308] sm:$0xff]
        %v333 = vld [vmem:[#allocation5 + $0x310] sm:$0xff]
        %v334 = vld [vmem:[#allocation5 + $0x318] sm:$0xff]
        %v335 = vld [vmem:[#allocation5 + $0x320] sm:$0xff]
        %v336 = vld [vmem:[#allocation5 + $0x328] sm:$0xff]
        %v337 = vld [vmem:[#allocation5 + $0x330] sm:$0xff]
        %v338 = vld [vmem:[#allocation5 + $0x338] sm:$0xff]
        %v339 = vld [vmem:[#allocation5 + $0x340] sm:$0xff]
        %v340 = vld [vmem:[#allocation5 + $0x348] sm:$0xff]
        %v341 = vld [vmem:[#allocation5 + $0x350] sm:$0xff]
        %v342 = vld [vmem:[#allocation5 + $0x358] sm:$0xff]
        %v343 = vld [vmem:[#allocation5 + $0x360] sm:$0xff]
        %v344 = vld [vmem:[#allocation5 + $0x368] sm:$0xff]
        %v345 = vld [vmem:[#allocation5 + $0x370] sm:$0xff]
        %v346 = vld [vmem:[#allocation5 + $0x378] sm:$0xff]
        %v347 = vld [vmem:[#allocation5 + $0x380] sm:$0xff]
        %v348 = vld [vmem:[#allocation5 + $0x388] sm:$0xff]
        %v349 = vld [vmem:[#allocation5 + $0x390] sm:$0xff]
        %v350 = vld [vmem:[#allocation5 + $0x398] sm:$0xff]
        %v351 = vld [vmem:[#allocation5 + $0x3a0] sm:$0xff]
        %v352 = vld [vmem:[#allocation5 + $0x3a8] sm:$0xff]
        %v353 = vld [vmem:[#allocation5 + $0x3b0] sm:$0xff]
        %v354 = vld [vmem:[#allocation5 + $0x3b8] sm:$0xff]
        %v355 = vld [vmem:[#allocation5 + $0x3c0] sm:$0xff]
        %v356 = vld [vmem:[#allocation5 + $0x3c8] sm:$0xff]
        %v357 = vld [vmem:[#allocation5 + $0x3d0] sm:$0xff]
        %v358 = vld [vmem:[#allocation5 + $0x3d8] sm:$0xff]
        %v359 = vld [vmem:[#allocation5 + $0x3e0] sm:$0xff]
        %v360 = vld [vmem:[#allocation5 + $0x3e8] sm:$0xff]
        %v361 = vld [vmem:[#allocation5 + $0x3f0] sm:$0xff]
        %v362 = vld [vmem:[#allocation5 + $0x3f8] sm:$0xff]
        %363 = vmatpush.msra.mxu0 %v295
        %364 = vmatpush.msra.mxu0 %v291
        %365 = vmatpush.msra.mxu0 %v287
        %366 = vmatpush.msra.mxu0 %v283
        %367 = vmatpush.msra.mxu0 %v279
        %368 = vmatpush.msra.mxu0 %v275
        %369 = vmatpush.msra.mxu0 %v271
        %370 = vmatpush.msra.mxu0 %v267
        %371 = vmatpush.msra.mxu0 %v263
        %372 = vmatpush.msra.mxu0 %v259
        %373 = vmatpush.msra.mxu0 %v255
        %374 = vmatpush.msra.mxu0 %v251
        %375 = vmatpush.msra.mxu0 %v247
        %376 = vmatpush.msra.mxu0 %v243
        %377 = vmatpush.msra.mxu0 %v239
        %378 = vmatpush.msra.mxu0 %v235
        %379 = vmatmul.f32.gmra.mxu0 %v227
        %v380 = vpop.f32.mrf.mxu0
        %v381 = vadd.f32 0.0, %v380
        %382 = vmatmul.f32.gmra.mxu0 %v229
        %v383 = vpop.f32.mrf.mxu0
        %v384 = vadd.f32 0.0, %v383
        %385 = vmatmul.f32.gmra.mxu0 %v231
        %v386 = vpop.f32.mrf.mxu0
        %v387 = vadd.f32 0.0, %v386
        %388 = vmatmul.f32.gmra.mxu0 %v233
        %v389 = vpop.f32.mrf.mxu0
        %v390 = vadd.f32 0.0, %v389
        %391 = vdwg.mxu0
        %392 = vmatpush.msra.mxu0 %v359
        %393 = vmatpush.msra.mxu0 %v355
        %394 = vmatpush.msra.mxu0 %v351
        %395 = vmatpush.msra.mxu0 %v347
        %396 = vmatpush.msra.mxu0 %v343
        %397 = vmatpush.msra.mxu0 %v339
        %398 = vmatpush.msra.mxu0 %v335
        %399 = vmatpush.msra.mxu0 %v331
        %400 = vmatpush.msra.mxu0 %v327
        %401 = vmatpush.msra.mxu0 %v323
        %402 = vmatpush.msra.mxu0 %v319
        %403 = vmatpush.msra.mxu0 %v315
        %404 = vmatpush.msra.mxu0 %v311
        %405 = vmatpush.msra.mxu0 %v307
        %406 = vmatpush.msra.mxu0 %v303
        %407 = vmatpush.msra.mxu0 %v299
        %408 = vmatmul.f32.gmra.mxu0 %v228
        %v409 = vpop.f32.mrf.mxu0
        %v410 = vadd.f32 %v381, %v409
        %411 = vmatmul.f32.gmra.mxu0 %v230
        %v412 = vpop.f32.mrf.mxu0
        %v413 = vadd.f32 %v384, %v412
        %414 = vmatmul.f32.gmra.mxu0 %v232
        %v415 = vpop.f32.mrf.mxu0
        %v416 = vadd.f32 %v387, %v415
        %417 = vmatmul.f32.gmra.mxu0 %v234
        %v418 = vpop.f32.mrf.mxu0
        %v419 = vadd.f32 %v390, %v418
        %420 = vdwg.mxu0
        %421 = vmatpush.msra.mxu0 %v296
        %422 = vmatpush.msra.mxu0 %v292
        %423 = vmatpush.msra.mxu0 %v288
        %424 = vmatpush.msra.mxu0 %v284
        %425 = vmatpush.msra.mxu0 %v280
        %426 = vmatpush.msra.mxu0 %v276
        %427 = vmatpush.msra.mxu0 %v272
        %428 = vmatpush.msra.mxu0 %v268
        %429 = vmatpush.msra.mxu0 %v264
        %430 = vmatpush.msra.mxu0 %v260
        %431 = vmatpush.msra.mxu0 %v256
        %432 = vmatpush.msra.mxu0 %v252
        %433 = vmatpush.msra.mxu0 %v248
        %434 = vmatpush.msra.mxu0 %v244
        %435 = vmatpush.msra.mxu0 %v240
        %436 = vmatpush.msra.mxu0 %v236
        %437 = vmatmul.f32.gmra.mxu0 %v227
        %v438 = vpop.f32.mrf.mxu0
        %v439 = vadd.f32 0.0, %v438
        %440 = vmatmul.f32.gmra.mxu0 %v229
        %v441 = vpop.f32.mrf.mxu0
        %v442 = vadd.f32 0.0, %v441
        %443 = vmatmul.f32.gmra.mxu0 %v231
        %v444 = vpop.f32.mrf.mxu0
        %v445 = vadd.f32 0.0, %v444
        %446 = vmatmul.f32.gmra.mxu0 %v233
        %v447 = vpop.f32.mrf.mxu0
        %v448 = vadd.f32 0.0, %v447
        %449 = vdwg.mxu0
        %450 = vmatpush.msra.mxu0 %v360
        %451 = vmatpush.msra.mxu0 %v356
        %452 = vmatpush.msra.mxu0 %v352
        %453 = vmatpush.msra.mxu0 %v348
        %454 = vmatpush.msra.mxu0 %v344
        %455 = vmatpush.msra.mxu0 %v340
        %456 = vmatpush.msra.mxu0 %v336
        %457 = vmatpush.msra.mxu0 %v332
        %458 = vmatpush.msra.mxu0 %v328
        %459 = vmatpush.msra.mxu0 %v324
        %460 = vmatpush.msra.mxu0 %v320
        %461 = vmatpush.msra.mxu0 %v316
        %462 = vmatpush.msra.mxu0 %v312
        %463 = vmatpush.msra.mxu0 %v308
        %464 = vmatpush.msra.mxu0 %v304
        %465 = vmatpush.msra.mxu0 %v300
        %466 = vmatmul.f32.gmra.mxu0 %v228
        %v467 = vpop.f32.mrf.mxu0
        %v468 = vadd.f32 %v439, %v467
        %469 = vmatmul.f32.gmra.mxu0 %v230
        %v470 = vpop.f32.mrf.mxu0
        %v471 = vadd.f32 %v442, %v470
        %472 = vmatmul.f32.gmra.mxu0 %v232
        %v473 = vpop.f32.mrf.mxu0
        %v474 = vadd.f32 %v445, %v473
        %475 = vmatmul.f32.gmra.mxu0 %v234
        %v476 = vpop.f32.mrf.mxu0
        %v477 = vadd.f32 %v448, %v476
        %478 = vdwg.mxu0
        %479 = vmatpush.msra.mxu0 %v297
        %480 = vmatpush.msra.mxu0 %v293
        %481 = vmatpush.msra.mxu0 %v289
        %482 = vmatpush.msra.mxu0 %v285
        %483 = vmatpush.msra.mxu0 %v281
        %484 = vmatpush.msra.mxu0 %v277
        %485 = vmatpush.msra.mxu0 %v273
        %486 = vmatpush.msra.mxu0 %v269
        %487 = vmatpush.msra.mxu0 %v265
        %488 = vmatpush.msra.mxu0 %v261
        %489 = vmatpush.msra.mxu0 %v257
        %490 = vmatpush.msra.mxu0 %v253
        %491 = vmatpush.msra.mxu0 %v249
        %492 = vmatpush.msra.mxu0 %v245
        %493 = vmatpush.msra.mxu0 %v241
        %494 = vmatpush.msra.mxu0 %v237
        %495 = vmatmul.f32.gmra.mxu0 %v227
        %v496 = vpop.f32.mrf.mxu0
        %v497 = vadd.f32 0.0, %v496
        %498 = vmatmul.f32.gmra.mxu0 %v229
        %v499 = vpop.f32.mrf.mxu0
        %v500 = vadd.f32 0.0, %v499
        %501 = vmatmul.f32.gmra.mxu0 %v231
        %v502 = vpop.f32.mrf.mxu0
        %v503 = vadd.f32 0.0, %v502
        %504 = vmatmul.f32.gmra.mxu0 %v233
        %v505 = vpop.f32.mrf.mxu0
        %v506 = vadd.f32 0.0, %v505
        %507 = vdwg.mxu0
        %508 = vmatpush.msra.mxu0 %v361
        %509 = vmatpush.msra.mxu0 %v357
        %510 = vmatpush.msra.mxu0 %v353
        %511 = vmatpush.msra.mxu0 %v349
        %512 = vmatpush.msra.mxu0 %v345
        %513 = vmatpush.msra.mxu0 %v341
        %514 = vmatpush.msra.mxu0 %v337
        %515 = vmatpush.msra.mxu0 %v333
        %516 = vmatpush.msra.mxu0 %v329
        %517 = vmatpush.msra.mxu0 %v325
        %518 = vmatpush.msra.mxu0 %v321
        %519 = vmatpush.msra.mxu0 %v317
        %520 = vmatpush.msra.mxu0 %v313
        %521 = vmatpush.msra.mxu0 %v309
        %522 = vmatpush.msra.mxu0 %v305
        %523 = vmatpush.msra.mxu0 %v301
        %524 = vmatmul.f32.gmra.mxu0 %v228
        %v525 = vpop.f32.mrf.mxu0
        %v526 = vadd.f32 %v497, %v525
        %527 = vmatmul.f32.gmra.mxu0 %v230
        %v528 = vpop.f32.mrf.mxu0
        %v529 = vadd.f32 %v500, %v528
        %530 = vmatmul.f32.gmra.mxu0 %v232
        %v531 = vpop.f32.mrf.mxu0
        %v532 = vadd.f32 %v503, %v531
        %533 = vmatmul.f32.gmra.mxu0 %v234
        %v534 = vpop.f32.mrf.mxu0
        %v535 = vadd.f32 %v506, %v534
        %536 = vdwg.mxu0
        %537 = vmatpush.msra.mxu0 %v298
        %538 = vmatpush.msra.mxu0 %v294
        %539 = vmatpush.msra.mxu0 %v290
        %540 = vmatpush.msra.mxu0 %v286
        %541 = vmatpush.msra.mxu0 %v282
        %542 = vmatpush.msra.mxu0 %v278
        %543 = vmatpush.msra.mxu0 %v274
        %544 = vmatpush.msra.mxu0 %v270
        %545 = vmatpush.msra.mxu0 %v266
        %546 = vmatpush.msra.mxu0 %v262
        %547 = vmatpush.msra.mxu0 %v258
        %548 = vmatpush.msra.mxu0 %v254
        %549 = vmatpush.msra.mxu0 %v250
        %550 = vmatpush.msra.mxu0 %v246
        %551 = vmatpush.msra.mxu0 %v242
        %552 = vmatpush.msra.mxu0 %v238
        %553 = vmatmul.f32.gmra.mxu0 %v227
        %v554 = vpop.f32.mrf.mxu0
        %v555 = vadd.f32 0.0, %v554
        %556 = vmatmul.f32.gmra.mxu0 %v229
        %v557 = vpop.f32.mrf.mxu0
        %v558 = vadd.f32 0.0, %v557
        %559 = vmatmul.f32.gmra.mxu0 %v231
        %v560 = vpop.f32.mrf.mxu0
        %v561 = vadd.f32 0.0, %v560
        %562 = vmatmul.f32.gmra.mxu0 %v233
        %v563 = vpop.f32.mrf.mxu0
        %v564 = vadd.f32 0.0, %v563
        %565 = vdwg.mxu0
        %566 = vmatpush.msra.mxu0 %v362
        %567 = vmatpush.msra.mxu0 %v358
        %568 = vmatpush.msra.mxu0 %v354
        %569 = vmatpush.msra.mxu0 %v350
        %570 = vmatpush.msra.mxu0 %v346
        %571 = vmatpush.msra.mxu0 %v342
        %572 = vmatpush.msra.mxu0 %v338
        %573 = vmatpush.msra.mxu0 %v334
        %574 = vmatpush.msra.mxu0 %v330
        %575 = vmatpush.msra.mxu0 %v326
        %576 = vmatpush.msra.mxu0 %v322
        %577 = vmatpush.msra.mxu0 %v318
        %578 = vmatpush.msra.mxu0 %v314
        %579 = vmatpush.msra.mxu0 %v310
        %580 = vmatpush.msra.mxu0 %v306
        %581 = vmatpush.msra.mxu0 %v302
        %582 = vmatmul.f32.gmra.mxu0 %v228
        %v583 = vpop.f32.mrf.mxu0
        %v584 = vadd.f32 %v555, %v583
        %585 = vmatmul.f32.gmra.mxu0 %v230
        %v586 = vpop.f32.mrf.mxu0
        %v587 = vadd.f32 %v558, %v586
        %588 = vmatmul.f32.gmra.mxu0 %v232
        %v589 = vpop.f32.mrf.mxu0
        %v590 = vadd.f32 %v561, %v589
        %591 = vmatmul.f32.gmra.mxu0 %v234
        %v592 = vpop.f32.mrf.mxu0
        %v593 = vadd.f32 %v564, %v592
        %594 = vdwg.mxu0
        %v595 = vld [vmem:[#allocation7] sm:$0xff]
        %v596 = vld [vmem:[#allocation7 + $0x8] sm:$0xff]
        %vm597 = vcmask 261120
        %v599 = vsel %vm597, %v595, 0
        %v602 = vsel %vm597, %v596, 0
        %604 = vmatpush.msra.mxu0 0.0
        %605 = vmatpush.msra.mxu0 0.0
        %606 = vmatpush.msra.mxu0 0.0
        %607 = vmatpush.msra.mxu0 0.0
        %608 = vmatpush.msra.mxu0 0.0
        %609 = vmatpush.msra.mxu0 0.0
        %610 = vmatpush.msra.mxu0 0.0
        %611 = vmatpush.msra.mxu0 0.0
        %612 = vmatpush.msra.mxu0 0.0
        %613 = vmatpush.msra.mxu0 0.0
        %614 = vmatpush.msra.mxu0 0.0
        %615 = vmatpush.msra.mxu0 0.0
        %616 = vmatpush.msra.mxu0 %v529
        %617 = vmatpush.msra.mxu0 %v526
        %618 = vmatpush.msra.mxu0 %v413
        %619 = vmatpush.msra.mxu0 %v410
        %620 = vmatmul.f32.gmra.mxu0 %v599
        %v621 = vpop.f32.mrf.mxu0
        %v622 = vadd.f32 0.0, %v621
        %623 = vmatmul.f32.gmra.mxu0 %v602
        %v624 = vpop.f32.mrf.mxu0
        %v625 = vadd.f32 0.0, %v624
        %626 = vdwg.mxu0
        %627 = vmatpush.msra.mxu0 0.0
        %628 = vmatpush.msra.mxu0 0.0
        %629 = vmatpush.msra.mxu0 0.0
        %630 = vmatpush.msra.mxu0 0.0
        %631 = vmatpush.msra.mxu0 0.0
        %632 = vmatpush.msra.mxu0 0.0
        %633 = vmatpush.msra.mxu0 0.0
        %634 = vmatpush.msra.mxu0 0.0
        %635 = vmatpush.msra.mxu0 0.0
        %636 = vmatpush.msra.mxu0 0.0
        %637 = vmatpush.msra.mxu0 0.0
        %638 = vmatpush.msra.mxu0 0.0
        %639 = vmatpush.msra.mxu0 %v587
        %640 = vmatpush.msra.mxu0 %v584
        %641 = vmatpush.msra.mxu0 %v471
        %642 = vmatpush.msra.mxu0 %v468
        %643 = vmatmul.f32.gmra.mxu0 %v599
        %v644 = vpop.f32.mrf.mxu0
        %v645 = vadd.f32 0.0, %v644
        %646 = vmatmul.f32.gmra.mxu0 %v602
        %v647 = vpop.f32.mrf.mxu0
        %v648 = vadd.f32 0.0, %v647
        %649 = vdwg.mxu0
        %650 = vst [vmem:[%s224] sm:$0xff] %v622
        %651 = vst [vmem:[%s224 + $0x8] sm:$0xff] %v645
        %652 = vst [vmem:[%s224 + $0x10] sm:$0xff] %v625
        %653 = vst [vmem:[%s224 + $0x18] sm:$0xff] %v648
        %654 = vmatpush.msra.mxu0 0.0
        %655 = vmatpush.msra.mxu0 0.0
        %656 = vmatpush.msra.mxu0 0.0
        %657 = vmatpush.msra.mxu0 0.0
        %658 = vmatpush.msra.mxu0 0.0
        %659 = vmatpush.msra.mxu0 0.0
        %660 = vmatpush.msra.mxu0 0.0
        %661 = vmatpush.msra.mxu0 0.0
        %662 = vmatpush.msra.mxu0 0.0
        %663 = vmatpush.msra.mxu0 0.0
        %664 = vmatpush.msra.mxu0 0.0
        %665 = vmatpush.msra.mxu0 0.0
        %666 = vmatpush.msra.mxu0 %v535
        %667 = vmatpush.msra.mxu0 %v532
        %668 = vmatpush.msra.mxu0 %v419
        %669 = vmatpush.msra.mxu0 %v416
        %670 = vmatmul.f32.gmra.mxu0 %v599
        %v671 = vpop.f32.mrf.mxu0
        %v672 = vadd.f32 0.0, %v671
        %673 = vmatmul.f32.gmra.mxu0 %v602
        %v674 = vpop.f32.mrf.mxu0
        %v675 = vadd.f32 0.0, %v674
        %676 = vdwg.mxu0
        %677 = vmatpush.msra.mxu0 0.0
        %678 = vmatpush.msra.mxu0 0.0
        %679 = vmatpush.msra.mxu0 0.0
        %680 = vmatpush.msra.mxu0 0.0
        %681 = vmatpush.msra.mxu0 0.0
        %682 = vmatpush.msra.mxu0 0.0
        %683 = vmatpush.msra.mxu0 0.0
        %684 = vmatpush.msra.mxu0 0.0
        %685 = vmatpush.msra.mxu0 0.0
        %686 = vmatpush.msra.mxu0 0.0
        %687 = vmatpush.msra.mxu0 0.0
        %688 = vmatpush.msra.mxu0 0.0
        %689 = vmatpush.msra.mxu0 %v593
        %690 = vmatpush.msra.mxu0 %v590
        %691 = vmatpush.msra.mxu0 %v477
        %692 = vmatpush.msra.mxu0 %v474
        %693 = vmatmul.f32.gmra.mxu0 %v599
        %v694 = vpop.f32.mrf.mxu0
        %v695 = vadd.f32 0.0, %v694
        %696 = vmatmul.f32.gmra.mxu0 %v602
        %v697 = vpop.f32.mrf.mxu0
        %v698 = vadd.f32 0.0, %v697
        %699 = vdwg.mxu0
        %s700 = scalar_lea.vmem %s224, 32 [#allocation8]
        %701 = vst [vmem:[%s700] sm:$0xff] %v672
        %702 = vst [vmem:[%s700 + $0x8] sm:$0xff] %v695
        %703 = vst [vmem:[%s700 + $0x10] sm:$0xff] %v675
        %704 = vst [vmem:[%s700 + $0x18] sm:$0xff] %v698
        %s705 = sand.u32 %s97, 1
        %s706 = scalar_lea.sflag [#allocation4], %s705
        %s707 = sand.u32 %s97, 1
        %s708 = smul.addr %s707, 64
        %s709 = scalar_lea.vmem [#allocation8], %s708
        // Predicated region
        $region45: #{tpu_custom_call.1} parent=31 // pred_check
          %p710 = pneg %p107
        $region46: #{tpu_custom_call.1} parent=31 // pred_check_branch
          %712 = sbr.rel (%p710) target = $region48
        $region47: #{tpu_custom_call.1} parent=31 // pred_region
          %s713 = smul.u32 2, %s21
          %715 = vsyncadd %s706, 0
          %s716 = smul.addr %s713, 4
          %s717 = smul.addr %s716, 8
          %s718 = scalar_lea.hbm %s3, %s717
          %s719 = sshll.u32 %s709, 4
          %s720 = int_to_ptr.vmem [resolvable:$true] %s719
          %s721 = sshll.u32 %s718, 4
          %s722 = int_to_ptr.hbm [resolvable:$true] %s721
          %727 = dma.vmem_to_hbm [thread:$0]  %s720, 1024, %s722, %s706, 256, 256, 16
        $region48: #{tpu_custom_call.1} parent=31 // pred_fallthru
          _
      $region32: #{tpu_custom_call.1} parent=5 // pred_fallthru
        _
      %p728 = scmp.le.s32.totalorder 2, %s16
      // Predicated region
      $region49: #{tpu_custom_call.1} parent=5 // pred_check
        %p729 = pneg %p728
      $region50: #{tpu_custom_call.1} parent=5 // pred_check_branch
        %731 = sbr.rel (%p729) target = $region52
      $region51: #{tpu_custom_call.1} parent=5 // pred_region
        %s732 = ssub.s32 %s16, 2
        // Predicated region
        $region53: #{tpu_custom_call.1} parent=51 // pred_check
          %p733 = pneg %p113
        $region54: #{tpu_custom_call.1} parent=51 // pred_check_branch
          %735 = sbr.rel (%p733) target = $region56
        $region55: #{tpu_custom_call.1} parent=51 // pred_region
          %s736 = sand.u32 %s98, 1
          %s737 = scalar_lea.sflag [#allocation4], %s736
          %s738 = sand.u32 %s98, 1
          %s739 = smul.addr %s738, 64
          %s740 = scalar_lea.vmem [#allocation8], %s739
          %742 = dma.done %s737, 1024
        $region56: #{tpu_custom_call.1} parent=51 // pred_fallthru
          _
      $region52: #{tpu_custom_call.1} parent=5 // pred_fallthru
        _
    $region6: #{tpu_custom_call.1} parent=1 // loop_footer
      %s20 = sadd.s32 1, %s16
    $region7: #{tpu_custom_call.1} parent=1 // loop_footer_branch
      %15 = sbr.rel target = $region3
    $region8: #{tpu_custom_call.1} parent=1 // loop_exit
      _
    %743 = vsyncpa [#allocation3], 1
    %s744 = scalar_lea.sflag [#allocation3], 1
    %745 = vsyncpa %s744, 1
    %746 = vsyncpa [#allocation6], 1
    %747 = vsyncpa [#allocation4], 1
    %s748 = scalar_lea.sflag [#allocation4], 1
    %749 = vsyncpa %s748, 1

</llo_original>
